<compile_context>
chip_gen: v7x
topology: tpu7x:2x2x1
jax: 0.10.0
libtpu: 0.0.40
codegen_flags: <defaults>
</compile_context>

<pallas_src>
import functools

import jax
import jax.numpy as jnp
from jax.experimental import pallas as pl
from jax.experimental.pallas import tpu as pltpu


def _round_up(x, m):
    return (x + m - 1) // m * m


def _tpu_vmem_capacity_bytes():
    """Per-TensorCore VMEM capacity, or None if it cannot be queried.

    Only used for tile / vmem_limit sizing; a failure here must never affect
    correctness, so we fall back to the most conservative (v7x-sized) value.
    """
    try:
        info = pltpu.get_tpu_info()
        cap = getattr(info, "vmem_capacity_bytes", None)
        if cap:
            return int(cap)
    except Exception:
        pass
    return None


def _attn_output_kernel(x_ref, res_ref, w_ref, b_ref, g_ref, beta_ref,
                        out_ref, *, eps, inv_n, matmul_dtype):
    # x_ref   : (TM, Din_p)    tile of hidden_states rows (native dtype)
    # res_ref : (TM, Dout_p)   tile of input_tensor (residual) rows
    # w_ref   : (Din_p, Dout_p) dense weight (torch nn.Linear weight, transposed)
    # b_ref   : (1, Dout_p)    dense bias   (f32, pre-cast in wrapper)
    # g_ref   : (1, Dout_p)    LayerNorm gamma (f32)
    # beta_ref: (1, Dout_p)    LayerNorm beta  (f32)
    # out_ref : (TM, Dout_p)

    x = x_ref[...]
    if matmul_dtype is not None:
        # v5e: bf16 operands give ~3-6x MXU throughput vs emulated f32.
        x = x.astype(matmul_dtype)

    # Dense on the MXU, f32 accumulation.
    y = jnp.dot(x, w_ref[...], preferred_element_type=jnp.float32)

    # Dropout is identity in eval/inference mode.
    # TODO(synk): training-mode dropout (pltpu.prng_seed + prng_random_bits mask).

    # Bias + residual add (f32 epilogue).
    y = y + b_ref[...] + res_ref[...].astype(jnp.float32)

    # LayerNorm over the (real) feature axis.  Two independent XLU reductions
    # that can overlap; var = E[y^2] - mean^2.  Feature-axis zero-padding (if
    # any) contributes exactly zero to both sums, and inv_n = 1/Dout_real, so
    # the statistics match torch.nn.LayerNorm (biased variance, eps in rsqrt).
    s1 = jnp.sum(y, axis=-1, keepdims=True)
    s2 = jnp.sum(y * y, axis=-1, keepdims=True)
    mean = s1 * inv_n
    var = s2 * inv_n - mean * mean
    inv_std = jax.lax.rsqrt(var + eps)

    out = (y - mean) * (inv_std * g_ref[...]) + beta_ref[...]
    out_ref[...] = out.astype(out_ref.dtype)


def attention_output(hidden_states, input_tensor, w, b, gamma, beta,
                     *, eps=1e-12, row_tile=512, matmul_dtype=None):
    """Fused dense + (eval) dropout + residual + LayerNorm.

    hidden_states: (B, S, Din)
    input_tensor : (B, S, Dout)
    w            : (Din, Dout)   (torch nn.Linear weight is (Dout, Din); pass W.T)
    b, gamma, beta: (Dout,)
    matmul_dtype : optional dtype for the MXU operands (e.g. jnp.bfloat16 on
                   v5e where f32 matmul is emulated).  None = native dtype.
    """
    B, S, Din = hidden_states.shape
    Dout = input_tensor.shape[-1]
    assert w.shape == (Din, Dout)
    rows = B * S
    out_dtype = hidden_states.dtype

    # ---- per-generation VMEM budget -----------------------------------------
    vmem_cap = _tpu_vmem_capacity_bytes()
    if vmem_cap is None:
        vmem_cap = 64 * 1024 * 1024                 # conservative (v7x-sized)
    # v7x signature: 64 MiB per TensorCore (and 2 TCs per chip).
    is_v7x_like = vmem_cap <= 64 * 1024 * 1024
    # Leave headroom for Mosaic internal scratch / semaphores / output buffers:
    # ~48 MiB on v7x, ~112 MiB on v5e/v6e.
    vmem_budget = max(vmem_cap - 16 * 1024 * 1024, 32 * 1024 * 1024)

    # ---- lane-dense / MXU-friendly feature padding (toy shapes only) ---------
    # Production shapes have Din % 128 == 0 and Dout % 128 == 0 -> no-ops.
    Din_p = _round_up(Din, 128)
    Dout_p = _round_up(Dout, 128)

    x2 = hidden_states.reshape(rows, Din)
    r2 = input_tensor.reshape(rows, Dout)
    if Din_p != Din:
        # Zero columns contribute nothing to the contraction.
        x2 = jnp.pad(x2, ((0, 0), (0, Din_p - Din)))
        w = jnp.pad(w, ((0, Din_p - Din), (0, 0)))
    if Dout_p != Dout:
        # Zero-padded output features stay exactly zero through dense+residual,
        # so LN statistics (computed with 1/Dout_real) are unchanged.
        r2 = jnp.pad(r2, ((0, 0), (0, Dout_p - Dout)))
        w = jnp.pad(w, ((0, 0), (0, Dout_p - Dout)))
        b = jnp.pad(b, (0, Dout_p - Dout))
        gamma = jnp.pad(gamma, (0, Dout_p - Dout))
        beta = jnp.pad(beta, (0, Dout_p - Dout))

    # Pre-cast the tiny per-feature params to f32 once (no per-tile casts).
    b2 = b.reshape(1, Dout_p).astype(jnp.float32)
    g2 = gamma.reshape(1, Dout_p).astype(jnp.float32)
    beta2 = beta.reshape(1, Dout_p).astype(jnp.float32)
    if matmul_dtype is not None:
        w = w.astype(matmul_dtype)

    # Explicit capability check for single-buffered grid-invariant operands.
    use_buffered_1 = hasattr(pl, "Buffered")

    # ---- choose the row tile --------------------------------------------------
    tm = max(8, _round_up(min(int(row_tile), _round_up(rows, 8)), 8))

    it_x = jnp.dtype(x2.dtype).itemsize
    it_r = jnp.dtype(r2.dtype).itemsize
    it_o = jnp.dtype(out_dtype).itemsize
    it_w = jnp.dtype(w.dtype).itemsize

    def _vmem_estimate(tile_m):
        nbuf_p = 1 if use_buffered_1 else 2
        return (2 * tile_m * Din_p * it_x            # x tiles (double-buffered)
                + 2 * tile_m * Dout_p * it_r         # residual tiles
                + 2 * tile_m * Dout_p * it_o         # output tiles
                + nbuf_p * (Din_p * Dout_p * it_w    # resident weight
                            + 3 * Dout_p * 4)        # f32 bias / gamma / beta
                + 4 * tile_m * Dout_p * 4)           # f32 epilogue live values
                                                     # (acc y, y*y, normed, cast)

    def _shrink(tile_m):
        while tile_m > 128 and _vmem_estimate(tile_m) > vmem_budget:
            tile_m = _round_up(tile_m // 2, 8)
        return tile_m

    tm = _shrink(tm)

    # v7x only: keep >=2 grid steps when there is enough work so both
    # TensorCores get a shard via dimension_semantics=("parallel",).  On
    # v5e/v6e a 2-step grid is just a serial loop, so skip it there.
    if is_v7x_like and rows >= 256 and pl.cdiv(rows, tm) < 2:
        tm = _shrink(_round_up(pl.cdiv(rows, 2), 8))

    grid = (pl.cdiv(rows, tm),)   # ragged last block is boundary-masked

    # Scoped VMEM limit: working-set-derived, capped below physical capacity.
    vmem_limit = int(min(max(int(_vmem_estimate(tm) * 1.25), 32 * 1024 * 1024),
                         vmem_budget))

    kernel = functools.partial(_attn_output_kernel,
                               eps=float(eps),
                               inv_n=1.0 / float(Dout),
                               matmul_dtype=matmul_dtype)

    cost = pl.CostEstimate(
        flops=int(2 * rows * Din_p * Dout_p + 10 * rows * Dout_p),
        transcendentals=int(rows),
        bytes_accessed=int(rows * Din_p * it_x
                           + rows * Dout_p * it_r
                           + rows * Dout_p * it_o
                           + Din_p * Dout_p * it_w
                           + 3 * Dout_p * 4))

    def _call(single_buffer_params):
        def _const_spec(shape):
            idx = lambda i: (0,) * len(shape)
            if single_buffer_params:
                # Grid-invariant operands: one buffer is enough (block index
                # never changes), halving their VMEM footprint.
                return pl.BlockSpec(shape, idx, pipeline_mode=pl.Buffered(1))
            return pl.BlockSpec(shape, idx)

        return pl.pallas_call(
            kernel,
            out_shape=jax.ShapeDtypeStruct((rows, Dout_p), out_dtype),
            grid_spec=pltpu.PrefetchScalarGridSpec(
                num_scalar_prefetch=0,
                grid=grid,
                in_specs=[
                    pl.BlockSpec((tm, Din_p), lambda i: (i, 0)),    # x rows
                    pl.BlockSpec((tm, Dout_p), lambda i: (i, 0)),   # residual
                    _const_spec((Din_p, Dout_p)),                   # W (resident)
                    _const_spec((1, Dout_p)),                       # bias
                    _const_spec((1, Dout_p)),                       # gamma
                    _const_spec((1, Dout_p)),                       # beta
                ],
                out_specs=pl.BlockSpec((tm, Dout_p), lambda i: (i, 0)),
            ),
            compiler_params=pltpu.CompilerParams(
                dimension_semantics=("parallel",),
                vmem_limit_bytes=vmem_limit),
            cost_estimate=cost,
        )(x2, r2, w, b2, g2, beta2)

    if use_buffered_1:
        try:
            out = _call(True)
        except Exception:
            # Narrow capability fallback: only the `pipeline_mode=pl.Buffered(1)`
            # hint differs below; a genuine shape/lowering bug fails again here
            # and propagates (nothing is permanently swallowed).
            out = _call(False)
    else:
        out = _call(False)

    if Dout_p != Dout:
        out = out[:, :Dout]       # toy-shape path only; production is zero-copy
    return out.reshape(B, S, Dout)


def _reference(hidden_states, input_tensor, w, b, gamma, beta, eps):
    y = jnp.einsum("bsd,de->bse", hidden_states, w) + b
    y = y + input_tensor
    mean = jnp.mean(y, axis=-1, keepdims=True)
    var = jnp.mean((y - mean) ** 2, axis=-1, keepdims=True)
    return (y - mean) * jax.lax.rsqrt(var + eps) * gamma + beta


if __name__ == "__main__":
    # Config: num_heads=4, attention_size=8 -> all_head_size=32; kernel_size=32
    num_heads, attention_size = 4, 8
    all_head_size = num_heads * attention_size      # Din = 32
    kernel_size = 32                                # Dout = 32
    layer_norm_eps = 1e-12
    B, S = 2, 8

    key = jax.random.PRNGKey(0)
    k1, k2, k3, k4 = jax.random.split(key, 4)

    hidden_states = jax.random.normal(k1, (B, S, all_head_size), dtype=jnp.float32)
    input_tensor = jax.random.normal(k2, (B, S, kernel_size), dtype=jnp.float32)

    # Deterministic parameter init (matches nn.Linear / nn.LayerNorm shapes).
    bound = 1.0 / (all_head_size ** 0.5)
    w_torch = jax.random.uniform(k3, (kernel_size, all_head_size),
                                 minval=-bound, maxval=bound)  # torch layout (Dout, Din)
    w = w_torch.T                                              # (Din, Dout) for kernel
    b = jax.random.uniform(k4, (kernel_size,), minval=-bound, maxval=bound)
    gamma = jnp.ones((kernel_size,), dtype=jnp.float32)
    beta = jnp.zeros((kernel_size,), dtype=jnp.float32)

    out = attention_output(hidden_states, input_tensor, w, b, gamma, beta,
                           eps=layer_norm_eps)
    out = jax.block_until_ready(out)

    ref = _reference(hidden_states, input_tensor, w, b, gamma, beta, layer_norm_eps)
    assert out.shape == (B, S, kernel_size)
    assert jnp.allclose(out, ref, atol=1e-5, rtol=1e-5), "mismatch vs reference"

    print("KERNEL_OK")
</pallas_src>

<mosaic_0001>
module attributes {stable_mosaic.version = 11 : i64} {
  func.func @_attn_output_kernel(%arg0: i32, %arg1: memref<16x128xf32, #tpu.memory_space<vmem>>, %arg2: memref<16x128xf32, #tpu.memory_space<vmem>>, %arg3: memref<128x128xf32, #tpu.memory_space<vmem>>, %arg4: memref<1x128xf32, #tpu.memory_space<vmem>>, %arg5: memref<1x128xf32, #tpu.memory_space<vmem>>, %arg6: memref<1x128xf32, #tpu.memory_space<vmem>>, %arg7: memref<16x128xf32, #tpu.memory_space<vmem>>) attributes {dimension_semantics = [#tpu.dimension_semantics<parallel>], iteration_bounds = array<i64: 1>, scalar_prefetch = 0 : i64, scratch_operands = 0 : i64, tpu.core_type = #tpu.core_type<tc>, window_params = [{transform_indices = @transform_0, window_bounds = array<i64: 16, 128>}, {transform_indices = @transform_1, window_bounds = array<i64: 16, 128>}, {pipeline_mode = #tpu.pipeline_mode<synchronous>, transform_indices = @transform_2, window_bounds = array<i64: 128, 128>}, {pipeline_mode = #tpu.pipeline_mode<synchronous>, transform_indices = @transform_3, window_bounds = array<i64: 1, 128>}, {pipeline_mode = #tpu.pipeline_mode<synchronous>, transform_indices = @transform_4, window_bounds = array<i64: 1, 128>}, {pipeline_mode = #tpu.pipeline_mode<synchronous>, transform_indices = @transform_5, window_bounds = array<i64: 1, 128>}, {transform_indices = @transform_6, window_bounds = array<i64: 16, 128>}]} {
    %c0 = arith.constant 0 : index
    %c0_0 = arith.constant 0 : index
    %0 = vector.load %arg1[%c0, %c0_0] : memref<16x128xf32, #tpu.memory_space<vmem>>, vector<16x128xf32>
    %c0_1 = arith.constant 0 : index
    %c0_2 = arith.constant 0 : index
    %1 = vector.load %arg3[%c0_1, %c0_2] : memref<128x128xf32, #tpu.memory_space<vmem>>, vector<128x128xf32>
    %cst = arith.constant dense<0.000000e+00> : vector<16x128xf32>
    %2 = tpu.matmul %0, %1, %cst {dimension_numbers = #tpu.dot_dimension_numbers<[1], [0], [0], [1], [0, 0, 1, 1], [], []>} : vector<16x128xf32>, vector<128x128xf32>, vector<16x128xf32> -> vector<16x128xf32>
    %c0_3 = arith.constant 0 : index
    %c0_4 = arith.constant 0 : index
    %3 = vector.load %arg4[%c0_3, %c0_4] : memref<1x128xf32, #tpu.memory_space<vmem>>, vector<1x128xf32>
    %4 = vector.broadcast %3 : vector<1x128xf32> to vector<16x128xf32>
    %5 = arith.addf %2, %4 : vector<16x128xf32>
    %c0_5 = arith.constant 0 : index
    %c0_6 = arith.constant 0 : index
    %6 = vector.load %arg2[%c0_5, %c0_6] : memref<16x128xf32, #tpu.memory_space<vmem>>, vector<16x128xf32>
    %7 = arith.addf %5, %6 : vector<16x128xf32>
    %cst_7 = arith.constant dense<0.000000e+00> : vector<16xf32>
    %8 = vector.multi_reduction <add>, %7, %cst_7 [1] : vector<16x128xf32> to vector<16xf32>
    %9 = vector.shape_cast %8 : vector<16xf32> to vector<16x1xf32>
    %10 = arith.mulf %7, %7 : vector<16x128xf32>
    %cst_8 = arith.constant dense<0.000000e+00> : vector<16xf32>
    %11 = vector.multi_reduction <add>, %10, %cst_8 [1] : vector<16x128xf32> to vector<16xf32>
    %12 = vector.shape_cast %11 : vector<16xf32> to vector<16x1xf32>
    %cst_9 = arith.constant 3.125000e-02 : f32
    %13 = vector.broadcast %cst_9 : f32 to vector<16x1xf32>
    %14 = arith.mulf %9, %13 : vector<16x1xf32>
    %cst_10 = arith.constant 3.125000e-02 : f32
    %15 = vector.broadcast %cst_10 : f32 to vector<16x1xf32>
    %16 = arith.mulf %12, %15 : vector<16x1xf32>
    %17 = arith.mulf %14, %14 : vector<16x1xf32>
    %18 = arith.subf %16, %17 : vector<16x1xf32>
    %cst_11 = arith.constant 9.99999996E-13 : f32
    %19 = vector.broadcast %cst_11 : f32 to vector<16x1xf32>
    %20 = arith.addf %18, %19 : vector<16x1xf32>
    %21 = math.rsqrt %20 : vector<16x1xf32>
    %22 = vector.broadcast %14 : vector<16x1xf32> to vector<16x128xf32>
    %23 = arith.subf %7, %22 : vector<16x128xf32>
    %c0_12 = arith.constant 0 : index
    %c0_13 = arith.constant 0 : index
    %24 = vector.load %arg5[%c0_12, %c0_13] : memref<1x128xf32, #tpu.memory_space<vmem>>, vector<1x128xf32>
    %25 = vector.broadcast %21 : vector<16x1xf32> to vector<16x128xf32>
    %26 = vector.broadcast %24 : vector<1x128xf32> to vector<16x128xf32>
    %27 = arith.mulf %25, %26 : vector<16x128xf32>
    %28 = arith.mulf %23, %27 : vector<16x128xf32>
    %c0_14 = arith.constant 0 : index
    %c0_15 = arith.constant 0 : index
    %29 = vector.load %arg6[%c0_14, %c0_15] : memref<1x128xf32, #tpu.memory_space<vmem>>, vector<1x128xf32>
    %30 = vector.broadcast %29 : vector<1x128xf32> to vector<16x128xf32>
    %31 = arith.addf %28, %30 : vector<16x128xf32>
    %c0_16 = arith.constant 0 : index
    %c0_17 = arith.constant 0 : index
    %32 = vector.load %arg7[%c0_16, %c0_17] : memref<16x128xf32, #tpu.memory_space<vmem>>, vector<16x128xf32>
    tpu.vector_store %arg7[%c0_16, %c0_17], %31 {strides = array<i32>} : memref<16x128xf32, #tpu.memory_space<vmem>>, vector<16x128xf32>,
    return
  }
  func.func @transform_0(%arg0: i32) -> (i32, i32) {
    %c0_i32 = arith.constant 0 : i32
    %c0_i32_0 = arith.constant 0 : i32
    return %arg0, %c0_i32 : i32, i32
  }
  func.func @transform_1(%arg0: i32) -> (i32, i32) {
    %c0_i32 = arith.constant 0 : i32
    %c0_i32_0 = arith.constant 0 : i32
    return %arg0, %c0_i32 : i32, i32
  }
  func.func @transform_2(%arg0: i32) -> (i32, i32) {
    %c0_i32 = arith.constant 0 : i32
    %c0_i32_0 = arith.constant 0 : i32
    %c0_i32_1 = arith.constant 0 : i32
    return %c0_i32, %c0_i32_0 : i32, i32
  }
  func.func @transform_3(%arg0: i32) -> (i32, i32) {
    %c0_i32 = arith.constant 0 : i32
    %c0_i32_0 = arith.constant 0 : i32
    %c0_i32_1 = arith.constant 0 : i32
    return %c0_i32, %c0_i32_0 : i32, i32
  }
  func.func @transform_4(%arg0: i32) -> (i32, i32) {
    %c0_i32 = arith.constant 0 : i32
    %c0_i32_0 = arith.constant 0 : i32
    %c0_i32_1 = arith.constant 0 : i32
    return %c0_i32, %c0_i32_0 : i32, i32
  }
  func.func @transform_5(%arg0: i32) -> (i32, i32) {
    %c0_i32 = arith.constant 0 : i32
    %c0_i32_0 = arith.constant 0 : i32
    %c0_i32_1 = arith.constant 0 : i32
    return %c0_i32, %c0_i32_0 : i32, i32
  }
  func.func @transform_6(%arg0: i32) -> (i32, i32) {
    %c0_i32 = arith.constant 0 : i32
    %c0_i32_0 = arith.constant 0 : i32
    return %arg0, %c0_i32 : i32, i32
  }
}

module attributes {stable_mosaic.version = 11 : i64} {
  func.func @_attn_output_kernel(%arg0: i32, %arg1: memref<16x128xf32, #tpu.memory_space<vmem>>, %arg2: memref<16x128xf32, #tpu.memory_space<vmem>>, %arg3: memref<128x128xf32, #tpu.memory_space<vmem>>, %arg4: memref<1x128xf32, #tpu.memory_space<vmem>>, %arg5: memref<1x128xf32, #tpu.memory_space<vmem>>, %arg6: memref<1x128xf32, #tpu.memory_space<vmem>>, %arg7: memref<16x128xf32, #tpu.memory_space<vmem>>) attributes {dimension_semantics = [#tpu.dimension_semantics<parallel>], iteration_bounds = array<i64: 1>, scalar_prefetch = 0 : i64, scratch_operands = 0 : i64, tpu.core_type = #tpu.core_type<tc>, window_params = [{transform_indices = @transform_0, window_bounds = array<i64: 16, 128>}, {transform_indices = @transform_1, window_bounds = array<i64: 16, 128>}, {pipeline_mode = #tpu.pipeline_mode<synchronous>, transform_indices = @transform_2, window_bounds = array<i64: 128, 128>}, {pipeline_mode = #tpu.pipeline_mode<synchronous>, transform_indices = @transform_3, window_bounds = array<i64: 1, 128>}, {pipeline_mode = #tpu.pipeline_mode<synchronous>, transform_indices = @transform_4, window_bounds = array<i64: 1, 128>}, {pipeline_mode = #tpu.pipeline_mode<synchronous>, transform_indices = @transform_5, window_bounds = array<i64: 1, 128>}, {transform_indices = @transform_6, window_bounds = array<i64: 16, 128>}]} {
    %c0 = arith.constant 0 : index
    %c0_0 = arith.constant 0 : index
    %0 = vector.load %arg1[%c0, %c0_0] : memref<16x128xf32, #tpu.memory_space<vmem>>, vector<16x128xf32>
    %c0_1 = arith.constant 0 : index
    %c0_2 = arith.constant 0 : index
    %1 = vector.load %arg3[%c0_1, %c0_2] : memref<128x128xf32, #tpu.memory_space<vmem>>, vector<128x128xf32>
    %cst = arith.constant dense<0.000000e+00> : vector<16x128xf32>
    %2 = tpu.matmul %0, %1, %cst {dimension_numbers = #tpu.dot_dimension_numbers<[1], [0], [0], [1], [0, 0, 1, 1], [], []>} : vector<16x128xf32>, vector<128x128xf32>, vector<16x128xf32> -> vector<16x128xf32>
    %c0_3 = arith.constant 0 : index
    %c0_4 = arith.constant 0 : index
    %3 = vector.load %arg4[%c0_3, %c0_4] : memref<1x128xf32, #tpu.memory_space<vmem>>, vector<1x128xf32>
    %4 = vector.broadcast %3 : vector<1x128xf32> to vector<16x128xf32>
    %5 = arith.addf %2, %4 : vector<16x128xf32>
    %c0_5 = arith.constant 0 : index
    %c0_6 = arith.constant 0 : index
    %6 = vector.load %arg2[%c0_5, %c0_6] : memref<16x128xf32, #tpu.memory_space<vmem>>, vector<16x128xf32>
    %7 = arith.addf %5, %6 : vector<16x128xf32>
    %cst_7 = arith.constant dense<0.000000e+00> : vector<16xf32>
    %8 = vector.multi_reduction <add>, %7, %cst_7 [1] : vector<16x128xf32> to vector<16xf32>
    %9 = vector.shape_cast %8 : vector<16xf32> to vector<16x1xf32>
    %10 = arith.mulf %7, %7 : vector<16x128xf32>
    %cst_8 = arith.constant dense<0.000000e+00> : vector<16xf32>
    %11 = vector.multi_reduction <add>, %10, %cst_8 [1] : vector<16x128xf32> to vector<16xf32>
    %12 = vector.shape_cast %11 : vector<16xf32> to vector<16x1xf32>
    %cst_9 = arith.constant 3.125000e-02 : f32
    %13 = vector.broadcast %cst_9 : f32 to vector<16x1xf32>
    %14 = arith.mulf %9, %13 : vector<16x1xf32>
    %cst_10 = arith.constant 3.125000e-02 : f32
    %15 = vector.broadcast %cst_10 : f32 to vector<16x1xf32>
    %16 = arith.mulf %12, %15 : vector<16x1xf32>
    %17 = arith.mulf %14, %14 : vector<16x1xf32>
    %18 = arith.subf %16, %17 : vector<16x1xf32>
    %cst_11 = arith.constant 9.99999996E-13 : f32
    %19 = vector.broadcast %cst_11 : f32 to vector<16x1xf32>
    %20 = arith.addf %18, %19 : vector<16x1xf32>
    %21 = math.rsqrt %20 : vector<16x1xf32>
    %22 = vector.broadcast %14 : vector<16x1xf32> to vector<16x128xf32>
    %23 = arith.subf %7, %22 : vector<16x128xf32>
    %c0_12 = arith.constant 0 : index
    %c0_13 = arith.constant 0 : index
    %24 = vector.load %arg5[%c0_12, %c0_13] : memref<1x128xf32, #tpu.memory_space<vmem>>, vector<1x128xf32>
    %25 = vector.broadcast %21 : vector<16x1xf32> to vector<16x128xf32>
    %26 = vector.broadcast %24 : vector<1x128xf32> to vector<16x128xf32>
    %27 = arith.mulf %25, %26 : vector<16x128xf32>
    %28 = arith.mulf %23, %27 : vector<16x128xf32>
    %c0_14 = arith.constant 0 : index
    %c0_15 = arith.constant 0 : index
    %29 = vector.load %arg6[%c0_14, %c0_15] : memref<1x128xf32, #tpu.memory_space<vmem>>, vector<1x128xf32>
    %30 = vector.broadcast %29 : vector<1x128xf32> to vector<16x128xf32>
    %31 = arith.addf %28, %30 : vector<16x128xf32>
    %c0_16 = arith.constant 0 : index
    %c0_17 = arith.constant 0 : index
    %32 = vector.load %arg7[%c0_16, %c0_17] : memref<16x128xf32, #tpu.memory_space<vmem>>, vector<16x128xf32>
    tpu.vector_store %arg7[%c0_16, %c0_17], %31 {strides = array<i32>} : memref<16x128xf32, #tpu.memory_space<vmem>>, vector<16x128xf32>,
    return
  }
  func.func @transform_0(%arg0: i32) -> (i32, i32) {
    %c0_i32 = arith.constant 0 : i32
    %c0_i32_0 = arith.constant 0 : i32
    return %arg0, %c0_i32 : i32, i32
  }
  func.func @transform_1(%arg0: i32) -> (i32, i32) {
    %c0_i32 = arith.constant 0 : i32
    %c0_i32_0 = arith.constant 0 : i32
    return %arg0, %c0_i32 : i32, i32
  }
  func.func @transform_2(%arg0: i32) -> (i32, i32) {
    %c0_i32 = arith.constant 0 : i32
    %c0_i32_0 = arith.constant 0 : i32
    %c0_i32_1 = arith.constant 0 : i32
    return %c0_i32, %c0_i32_0 : i32, i32
  }
  func.func @transform_3(%arg0: i32) -> (i32, i32) {
    %c0_i32 = arith.constant 0 : i32
    %c0_i32_0 = arith.constant 0 : i32
    %c0_i32_1 = arith.constant 0 : i32
    return %c0_i32, %c0_i32_0 : i32, i32
  }
  func.func @transform_4(%arg0: i32) -> (i32, i32) {
    %c0_i32 = arith.constant 0 : i32
    %c0_i32_0 = arith.constant 0 : i32
    %c0_i32_1 = arith.constant 0 : i32
    return %c0_i32, %c0_i32_0 : i32, i32
  }
  func.func @transform_5(%arg0: i32) -> (i32, i32) {
    %c0_i32 = arith.constant 0 : i32
    %c0_i32_0 = arith.constant 0 : i32
    %c0_i32_1 = arith.constant 0 : i32
    return %c0_i32, %c0_i32_0 : i32, i32
  }
  func.func @transform_6(%arg0: i32) -> (i32, i32) {
    %c0_i32 = arith.constant 0 : i32
    %c0_i32_0 = arith.constant 0 : i32
    return %arg0, %c0_i32 : i32, i32
  }
}

</mosaic_0001>

<llo_original>
// kernel: tpu_custom_call.1
$region0: #{tpu_custom_call.1}
  #allocation0 [shape = 'u32[]', space=smem, size = 0x4, offset = 0x4, fixed_abs, tag = 'smem constant byte address 0x4 - core index']
  #allocation1 [shape = 'u32[144,128]{1,0:T(1,128)}', space=vmem, size = 0x12000, scoped, tag = 'internal scratch']
  %s0 = inlined_call_operand.hbm [shape: f32[16,128], index: 0, kind: input, shape index: {}]
  %s1 = inlined_call_operand.hbm [shape: f32[16,128], index: 1, kind: input, shape index: {}]
  %s2 = inlined_call_operand.hbm [shape: f32[128,128], index: 2, kind: input, shape index: {}]
  %s3 = inlined_call_operand.vmem [shape: f32[1,128], index: 3, kind: input, shape index: {}]
  %s4 = inlined_call_operand.vmem [shape: f32[1,128], index: 4, kind: input, shape index: {}]
  %s5 = inlined_call_operand.vmem [shape: f32[1,128], index: 5, kind: input, shape index: {}]
  %s6 = inlined_call_operand.hbm [shape: f32[16,128], index: 6, kind: output, shape index: {}]
  %s7 = sld [smem:[#allocation0]]
  $region46: #{tpu_custom_call.1} parent=0
    _
  %s9 = ssub.s32 1, %s7
  %s10 = scalar_select 0, %s9, %s7
  $region1: #{tpu_custom_call.1} parent=0
    #allocation2 [shape = 'u8[8192]{0}', space=vmem, size = 0x2000, scoped, tag = 'input window, operand 0, single buffered']
    #allocation3 [shape = 's32[1]{0}', space=sflag, size = 0x4, scoped, tag = 'scoped memory for tpu_custom_call.1']
    #allocation4 [shape = 's32[1]{0}', space=sflag, size = 0x4, scoped, tag = 'scoped memory for tpu_custom_call.1']
    #allocation5 [shape = 'u8[8192]{0}', space=vmem, size = 0x2000, scoped, tag = 'input window, operand 1, single buffered']
    #allocation6 [shape = 's32[1]{0}', space=sflag, size = 0x4, scoped, tag = 'scoped memory for tpu_custom_call.1']
    #allocation7 [shape = 'u8[65536]{0}', space=vmem, size = 0x10000, scoped, tag = 'input window, operand 2, single buffered']
    #allocation8 [shape = 'u8[8192]{0}', space=vmem, size = 0x2000, scoped, tag = 'output window, operand 0, single buffered']
    %11 = vsyncpa [#allocation3], 0
    %12 = vsyncpa [#allocation6], 0
    %13 = vsyncpa [#allocation4], 0
    // Predicated region
    $region2: #{tpu_custom_call.1} parent=1 // pred_check
      _
    $region3: #{tpu_custom_call.1} parent=1 // pred_check_branch
      %15 = sbr.rel (0) target = $region5
    $region4: #{tpu_custom_call.1} parent=1 // pred_region
      %s17 = ssub.s32 256, 256
      %18 = vsyncadd [#allocation3], %s17
      %s19 = sshll.u32 [#allocation2], 4
      %s20 = int_to_ptr.vmem [resolvable:$true] %s19
      %25 = dma.hbm_to_vmem [thread:$0]  %s0, 256, %s20, [#allocation3], 128, 128, 8
    $region5: #{tpu_custom_call.1} parent=1 // pred_fallthru
      _
    // Predicated region
    $region6: #{tpu_custom_call.1} parent=1 // pred_check
      _
    $region7: #{tpu_custom_call.1} parent=1 // pred_check_branch
      %27 = sbr.rel (0) target = $region9
    $region8: #{tpu_custom_call.1} parent=1 // pred_region
      %s29 = ssub.s32 256, 256
      %30 = vsyncadd [#allocation6], %s29
      %s31 = sshll.u32 [#allocation5], 4
      %s32 = int_to_ptr.vmem [resolvable:$true] %s31
      %37 = dma.hbm_to_vmem [thread:$0]  %s1, 256, %s32, [#allocation6], 128, 128, 8
    $region9: #{tpu_custom_call.1} parent=1 // pred_fallthru
      _
    // Predicated region
    $region10: #{tpu_custom_call.1} parent=1 // pred_check
      _
    $region11: #{tpu_custom_call.1} parent=1 // pred_check_branch
      %39 = sbr.rel (0) target = $region13
    $region12: #{tpu_custom_call.1} parent=1 // pred_region
      %s41 = ssub.s32 2048, 2048
      %42 = vsyncadd [#allocation6], %s41
      %s43 = sshll.u32 [#allocation7], 4
      %s44 = int_to_ptr.vmem [resolvable:$true] %s43
      %49 = dma.hbm_to_vmem [thread:$0]  %s2, 2048, %s44, [#allocation6], 128, 128, 8
    $region13: #{tpu_custom_call.1} parent=1 // pred_fallthru
      _
    // Predicated region
    $region14: #{tpu_custom_call.1} parent=1 // pred_check
      _
    $region15: #{tpu_custom_call.1} parent=1 // pred_check_branch
      %51 = sbr.rel (0) target = $region17
    $region16: #{tpu_custom_call.1} parent=1 // pred_region
      _
    $region17: #{tpu_custom_call.1} parent=1 // pred_fallthru
      _
    // Predicated region
    $region18: #{tpu_custom_call.1} parent=1 // pred_check
      _
    $region19: #{tpu_custom_call.1} parent=1 // pred_check_branch
      %53 = sbr.rel (0) target = $region21
    $region20: #{tpu_custom_call.1} parent=1 // pred_region
      _
    $region21: #{tpu_custom_call.1} parent=1 // pred_fallthru
      _
    // Predicated region
    $region22: #{tpu_custom_call.1} parent=1 // pred_check
      _
    $region23: #{tpu_custom_call.1} parent=1 // pred_check_branch
      %55 = sbr.rel (0) target = $region25
    $region24: #{tpu_custom_call.1} parent=1 // pred_region
      _
    $region25: #{tpu_custom_call.1} parent=1 // pred_fallthru
      _
    // Predicated region
    $region26: #{tpu_custom_call.1} parent=1 // pred_check
      _
    $region27: #{tpu_custom_call.1} parent=1 // pred_check_branch
      %57 = sbr.rel (0) target = $region29
    $region28: #{tpu_custom_call.1} parent=1 // pred_region
      %58 = dma.done [#allocation3], 256
    $region29: #{tpu_custom_call.1} parent=1 // pred_fallthru
      _
    // Predicated region
    $region30: #{tpu_custom_call.1} parent=1 // pred_check
      _
    $region31: #{tpu_custom_call.1} parent=1 // pred_check_branch
      %60 = sbr.rel (0) target = $region33
    $region32: #{tpu_custom_call.1} parent=1 // pred_region
      %61 = dma.done [#allocation6], 256
    $region33: #{tpu_custom_call.1} parent=1 // pred_fallthru
      _
    // Predicated region
    $region34: #{tpu_custom_call.1} parent=1 // pred_check
      _
    $region35: #{tpu_custom_call.1} parent=1 // pred_check_branch
      %63 = sbr.rel (0) target = $region37
    $region36: #{tpu_custom_call.1} parent=1 // pred_region
      %64 = dma.done [#allocation6], 2048
    $region37: #{tpu_custom_call.1} parent=1 // pred_fallthru
      _
    %v65 = vld [vmem:[#allocation2] sm:$0xff]
    %v66 = vld [vmem:[#allocation2 + $0x8] sm:$0xff]
    %v67 = vld [vmem:[#allocation7] sm:$0xff]
    %v68 = vld [vmem:[#allocation7 + $0x8] sm:$0xff]
    %v69 = vld [vmem:[#allocation7 + $0x10] sm:$0xff]
    %v70 = vld [vmem:[#allocation7 + $0x18] sm:$0xff]
    %v71 = vld [vmem:[#allocation7 + $0x20] sm:$0xff]
    %v72 = vld [vmem:[#allocation7 + $0x28] sm:$0xff]
    %v73 = vld [vmem:[#allocation7 + $0x30] sm:$0xff]
    %v74 = vld [vmem:[#allocation7 + $0x38] sm:$0xff]
    %v75 = vld [vmem:[#allocation7 + $0x40] sm:$0xff]
    %v76 = vld [vmem:[#allocation7 + $0x48] sm:$0xff]
    %v77 = vld [vmem:[#allocation7 + $0x50] sm:$0xff]
    %v78 = vld [vmem:[#allocation7 + $0x58] sm:$0xff]
    %v79 = vld [vmem:[#allocation7 + $0x60] sm:$0xff]
    %v80 = vld [vmem:[#allocation7 + $0x68] sm:$0xff]
    %v81 = vld [vmem:[#allocation7 + $0x70] sm:$0xff]
    %v82 = vld [vmem:[#allocation7 + $0x78] sm:$0xff]
    %v83 = vld [vmem:[%s3] sm:$0x1]
    %v85 = vlaneseq
    %v86 = vshrl.u32 %v85, 7
    %v87 = vsub.s32 0, %v86
    %v88 = vrot.slane %v83, %v87
    %90 = vmatprep.subr.mxu0 0.0
    %91 = vmatpush1.msra.mxu0 %v67
    %92 = vmatprep.subr.mxu0 0.0
    %93 = vmatpush1.msra.mxu0 %v68
    %94 = vmatprep.subr.mxu0 0.0
    %95 = vmatpush1.msra.mxu0 %v69
    %96 = vmatprep.subr.mxu0 0.0
    %97 = vmatpush1.msra.mxu0 %v70
    %98 = vmatprep.subr.mxu0 0.0
    %99 = vmatpush1.msra.mxu0 %v71
    %100 = vmatprep.subr.mxu0 0.0
    %101 = vmatpush1.msra.mxu0 %v72
    %102 = vmatprep.subr.mxu0 0.0
    %103 = vmatpush1.msra.mxu0 %v73
    %104 = vmatprep.subr.mxu0 0.0
    %105 = vmatpush1.msra.mxu0 %v74
    %106 = vmatprep.subr.mxu0 0.0
    %107 = vmatpush1.msra.mxu0 %v75
    %108 = vmatprep.subr.mxu0 0.0
    %109 = vmatpush1.msra.mxu0 %v76
    %110 = vmatprep.subr.mxu0 0.0
    %111 = vmatpush1.msra.mxu0 %v77
    %112 = vmatprep.subr.mxu0 0.0
    %113 = vmatpush1.msra.mxu0 %v78
    %114 = vmatprep.subr.mxu0 0.0
    %115 = vmatpush1.msra.mxu0 %v79
    %116 = vmatprep.subr.mxu0 0.0
    %117 = vmatpush1.msra.mxu0 %v80
    %118 = vmatprep.subr.mxu0 0.0
    %119 = vmatpush1.msra.mxu0 %v81
    %120 = vmatprep.subr.mxu0 0.0
    %121 = vmatpush1.msra.mxu0 %v82
    %122 = vmatprep.subr.mxu0 0.0
    %123 = vmatpush1.msra.mxu0 0.0
    %124 = vmatprep.subr.mxu0 0.0
    %125 = vmatpush1.msra.mxu0 0.0
    %126 = vmatprep.subr.mxu0 0.0
    %127 = vmatpush1.msra.mxu0 0.0
    %128 = vmatprep.subr.mxu0 0.0
    %129 = vmatpush1.msra.mxu0 0.0
    %130 = vmatprep.subr.mxu0 0.0
    %131 = vmatpush1.msra.mxu0 0.0
    %132 = vmatprep.subr.mxu0 0.0
    %133 = vmatpush1.msra.mxu0 0.0
    %134 = vmatprep.subr.mxu0 0.0
    %135 = vmatpush1.msra.mxu0 0.0
    %136 = vmatprep.subr.mxu0 0.0
    %137 = vmatpush1.msra.mxu0 0.0
    %138 = vmatprep.subr.mxu0 0.0
    %139 = vmatpush1.msra.mxu0 0.0
    %140 = vmatprep.subr.mxu0 0.0
    %141 = vmatpush1.msra.mxu0 0.0
    %142 = vmatprep.subr.mxu0 0.0
    %143 = vmatpush1.msra.mxu0 0.0
    %144 = vmatprep.subr.mxu0 0.0
    %145 = vmatpush1.msra.mxu0 0.0
    %146 = vmatprep.subr.mxu0 0.0
    %147 = vmatpush1.msra.mxu0 0.0
    %148 = vmatprep.subr.mxu0 0.0
    %149 = vmatpush1.msra.mxu0 0.0
    %150 = vmatprep.subr.mxu0 0.0
    %151 = vmatpush1.msra.mxu0 0.0
    %152 = vmatprep.subr.mxu0 0.0
    %153 = vmatpush1.msra.mxu0 0.0
    %154 = vmatprep.mubr.f32.mxu0 0.0
    %155 = vmatmul.mubr.f32.gmra.mrb[0].mxu0 %v65
    %v156 = vpop.f32.mrb[0].mxu0
    %v157 = vadd.f32 %v88, %v156
    %v158 = vpop.f32.mrb[0].mxu0
    %159 = vmatprep.mubr.f32.mxu0 0.0
    %160 = vmatmul.mubr.f32.gmra.mrb[0].mxu0 %v66
    %v161 = vpop.f32.mrb[0].mxu0
    %v162 = vadd.f32 %v88, %v161
    %v163 = vpop.f32.mrb[0].mxu0
    %164 = vdwg.mxu0
    %v165 = vld [vmem:[#allocation5] sm:$0xff]
    %v166 = vld [vmem:[#allocation5 + $0x8] sm:$0xff]
    %v167 = vadd.f32 %v157, %v165
    %v168 = vadd.f32 %v162, %v166
    %169 = vadd.xlane.f32.xlu0 %v167
    %v170 = vpop.xlane.xlu0 %169
    %171 = vadd.xlane.f32.xlu0 %v168
    %v172 = vpop.xlane.xlu0 %171
    %v173 = vmul.f32 %v167, %v167
    %v174 = vmul.f32 %v168, %v168
    %175 = vadd.xlane.f32.xlu0 %v173
    %v176 = vpop.xlane.xlu0 %175
    %177 = vadd.xlane.f32.xlu0 %v174
    %v178 = vpop.xlane.xlu0 %177
    %v179 = vmul.f32 %v170, 0.03125
    %v180 = vmul.f32 %v172, 0.03125
    %v181 = vmul.f32 %v176, 0.03125
    %v182 = vmul.f32 %v178, 0.03125
    %v183 = vmul.f32 %v179, %v179
    %v184 = vmul.f32 %v180, %v180
    %v185 = vsub.f32 %v181, %v183
    %v186 = vsub.f32 %v182, %v184
    %v187 = vadd.f32 %v185, 1e-12
    %v188 = vadd.f32 %v186, 1e-12
    %v189 = vrsqrt.pop %v187
    %v190 = vrsqrt.pop %v188
    %v191 = vsub.f32 %v167, %v179
    %v192 = vsub.f32 %v168, %v180
    %v193 = vld [vmem:[%s4] sm:$0x1]
    %v195 = vlaneseq
    %v196 = vshrl.u32 %v195, 7
    %v197 = vsub.s32 0, %v196
    %v198 = vrot.slane %v193, %v197
    %v200 = vmul.f32 %v189, %v198
    %v201 = vmul.f32 %v190, %v198
    %v202 = vmul.f32 %v191, %v200
    %v203 = vmul.f32 %v192, %v201
    %v204 = vld [vmem:[%s5] sm:$0x1]
    %v206 = vlaneseq
    %v207 = vshrl.u32 %v206, 7
    %v208 = vsub.s32 0, %v207
    %v209 = vrot.slane %v204, %v208
    %v211 = vadd.f32 %v202, %v209
    %v212 = vadd.f32 %v203, %v209
    %213 = vst [vmem:[#allocation8] sm:$0xff] %v211
    %214 = vst [vmem:[#allocation8 + $0x8] sm:$0xff] %v212
    // Predicated region
    $region38: #{tpu_custom_call.1} parent=1 // pred_check
      _
    $region39: #{tpu_custom_call.1} parent=1 // pred_check_branch
      %216 = sbr.rel (0) target = $region41
    $region40: #{tpu_custom_call.1} parent=1 // pred_region
      %s218 = ssub.s32 256, 256
      %219 = vsyncadd [#allocation4], %s218
      %s220 = sshll.u32 [#allocation8], 4
      %s221 = int_to_ptr.vmem [resolvable:$true] %s220
      %226 = dma.vmem_to_hbm [thread:$0]  %s221, 256, %s6, [#allocation4], 128, 128, 8
    $region41: #{tpu_custom_call.1} parent=1 // pred_fallthru
      _
    // Predicated region
    $region42: #{tpu_custom_call.1} parent=1 // pred_check
      _
    $region43: #{tpu_custom_call.1} parent=1 // pred_check_branch
      %228 = sbr.rel (0) target = $region45
    $region44: #{tpu_custom_call.1} parent=1 // pred_region
      %229 = dma.done [#allocation4], 256
    $region45: #{tpu_custom_call.1} parent=1 // pred_fallthru
      _
    %230 = vsyncpa [#allocation3], 1
    %231 = vsyncpa [#allocation6], 1
    %232 = vsyncpa [#allocation4], 1

// kernel: tpu_custom_call.1
$region0: #{tpu_custom_call.1}
  #allocation0 [shape = 'u32[]', space=smem, size = 0x4, offset = 0x4, fixed_abs, tag = 'smem constant byte address 0x4 - core index']
  #allocation1 [shape = 'u32[144,128]{1,0:T(1,128)}', space=vmem, size = 0x12000, scoped, tag = 'internal scratch']
  %s0 = inlined_call_operand.hbm [shape: f32[16,128], index: 0, kind: input, shape index: {}]
  %s1 = inlined_call_operand.hbm [shape: f32[16,128], index: 1, kind: input, shape index: {}]
  %s2 = inlined_call_operand.hbm [shape: f32[128,128], index: 2, kind: input, shape index: {}]
  %s3 = inlined_call_operand.vmem [shape: f32[1,128], index: 3, kind: input, shape index: {}]
  %s4 = inlined_call_operand.vmem [shape: f32[1,128], index: 4, kind: input, shape index: {}]
  %s5 = inlined_call_operand.vmem [shape: f32[1,128], index: 5, kind: input, shape index: {}]
  %s6 = inlined_call_operand.hbm [shape: f32[16,128], index: 6, kind: output, shape index: {}]
  %s7 = sld [smem:[#allocation0]]
  $region46: #{tpu_custom_call.1} parent=0
    _
  %s9 = ssub.s32 1, %s7
  %s10 = scalar_select 0, %s9, %s7
  $region1: #{tpu_custom_call.1} parent=0
    #allocation2 [shape = 'u8[8192]{0}', space=vmem, size = 0x2000, scoped, tag = 'input window, operand 0, single buffered']
    #allocation3 [shape = 's32[1]{0}', space=sflag, size = 0x4, scoped, tag = 'scoped memory for tpu_custom_call.1']
    #allocation4 [shape = 's32[1]{0}', space=sflag, size = 0x4, scoped, tag = 'scoped memory for tpu_custom_call.1']
    #allocation5 [shape = 'u8[8192]{0}', space=vmem, size = 0x2000, scoped, tag = 'input window, operand 1, single buffered']
    #allocation6 [shape = 's32[1]{0}', space=sflag, size = 0x4, scoped, tag = 'scoped memory for tpu_custom_call.1']
    #allocation7 [shape = 'u8[65536]{0}', space=vmem, size = 0x10000, scoped, tag = 'input window, operand 2, single buffered']
    #allocation8 [shape = 'u8[8192]{0}', space=vmem, size = 0x2000, scoped, tag = 'output window, operand 0, single buffered']
    %11 = vsyncpa [#allocation3], 0
    %12 = vsyncpa [#allocation6], 0
    %13 = vsyncpa [#allocation4], 0
    // Predicated region
    $region2: #{tpu_custom_call.1} parent=1 // pred_check
      _
    $region3: #{tpu_custom_call.1} parent=1 // pred_check_branch
      %15 = sbr.rel (0) target = $region5
    $region4: #{tpu_custom_call.1} parent=1 // pred_region
      %s17 = ssub.s32 256, 256
      %18 = vsyncadd [#allocation3], %s17
      %s19 = sshll.u32 [#allocation2], 4
      %s20 = int_to_ptr.vmem [resolvable:$true] %s19
      %25 = dma.hbm_to_vmem [thread:$0]  %s0, 256, %s20, [#allocation3], 128, 128, 8
    $region5: #{tpu_custom_call.1} parent=1 // pred_fallthru
      _
    // Predicated region
    $region6: #{tpu_custom_call.1} parent=1 // pred_check
      _
    $region7: #{tpu_custom_call.1} parent=1 // pred_check_branch
      %27 = sbr.rel (0) target = $region9
    $region8: #{tpu_custom_call.1} parent=1 // pred_region
      %s29 = ssub.s32 256, 256
      %30 = vsyncadd [#allocation6], %s29
      %s31 = sshll.u32 [#allocation5], 4
      %s32 = int_to_ptr.vmem [resolvable:$true] %s31
      %37 = dma.hbm_to_vmem [thread:$0]  %s1, 256, %s32, [#allocation6], 128, 128, 8
    $region9: #{tpu_custom_call.1} parent=1 // pred_fallthru
      _
    // Predicated region
    $region10: #{tpu_custom_call.1} parent=1 // pred_check
      _
    $region11: #{tpu_custom_call.1} parent=1 // pred_check_branch
      %39 = sbr.rel (0) target = $region13
    $region12: #{tpu_custom_call.1} parent=1 // pred_region
      %s41 = ssub.s32 2048, 2048
      %42 = vsyncadd [#allocation6], %s41
      %s43 = sshll.u32 [#allocation7], 4
      %s44 = int_to_ptr.vmem [resolvable:$true] %s43
      %49 = dma.hbm_to_vmem [thread:$0]  %s2, 2048, %s44, [#allocation6], 128, 128, 8
    $region13: #{tpu_custom_call.1} parent=1 // pred_fallthru
      _
    // Predicated region
    $region14: #{tpu_custom_call.1} parent=1 // pred_check
      _
    $region15: #{tpu_custom_call.1} parent=1 // pred_check_branch
      %51 = sbr.rel (0) target = $region17
    $region16: #{tpu_custom_call.1} parent=1 // pred_region
      _
    $region17: #{tpu_custom_call.1} parent=1 // pred_fallthru
      _
    // Predicated region
    $region18: #{tpu_custom_call.1} parent=1 // pred_check
      _
    $region19: #{tpu_custom_call.1} parent=1 // pred_check_branch
      %53 = sbr.rel (0) target = $region21
    $region20: #{tpu_custom_call.1} parent=1 // pred_region
      _
    $region21: #{tpu_custom_call.1} parent=1 // pred_fallthru
      _
    // Predicated region
    $region22: #{tpu_custom_call.1} parent=1 // pred_check
      _
    $region23: #{tpu_custom_call.1} parent=1 // pred_check_branch
      %55 = sbr.rel (0) target = $region25
    $region24: #{tpu_custom_call.1} parent=1 // pred_region
      _
    $region25: #{tpu_custom_call.1} parent=1 // pred_fallthru
      _
    // Predicated region
    $region26: #{tpu_custom_call.1} parent=1 // pred_check
      _
    $region27: #{tpu_custom_call.1} parent=1 // pred_check_branch
      %57 = sbr.rel (0) target = $region29
    $region28: #{tpu_custom_call.1} parent=1 // pred_region
      %58 = dma.done [#allocation3], 256
    $region29: #{tpu_custom_call.1} parent=1 // pred_fallthru
      _
    // Predicated region
    $region30: #{tpu_custom_call.1} parent=1 // pred_check
      _
    $region31: #{tpu_custom_call.1} parent=1 // pred_check_branch
      %60 = sbr.rel (0) target = $region33
    $region32: #{tpu_custom_call.1} parent=1 // pred_region
      %61 = dma.done [#allocation6], 256
    $region33: #{tpu_custom_call.1} parent=1 // pred_fallthru
      _
    // Predicated region
    $region34: #{tpu_custom_call.1} parent=1 // pred_check
      _
    $region35: #{tpu_custom_call.1} parent=1 // pred_check_branch
      %63 = sbr.rel (0) target = $region37
    $region36: #{tpu_custom_call.1} parent=1 // pred_region
      %64 = dma.done [#allocation6], 2048
    $region37: #{tpu_custom_call.1} parent=1 // pred_fallthru
      _
    %v65 = vld [vmem:[#allocation2] sm:$0xff]
    %v66 = vld [vmem:[#allocation2 + $0x8] sm:$0xff]
    %v67 = vld [vmem:[#allocation7] sm:$0xff]
    %v68 = vld [vmem:[#allocation7 + $0x8] sm:$0xff]
    %v69 = vld [vmem:[#allocation7 + $0x10] sm:$0xff]
    %v70 = vld [vmem:[#allocation7 + $0x18] sm:$0xff]
    %v71 = vld [vmem:[#allocation7 + $0x20] sm:$0xff]
    %v72 = vld [vmem:[#allocation7 + $0x28] sm:$0xff]
    %v73 = vld [vmem:[#allocation7 + $0x30] sm:$0xff]
    %v74 = vld [vmem:[#allocation7 + $0x38] sm:$0xff]
    %v75 = vld [vmem:[#allocation7 + $0x40] sm:$0xff]
    %v76 = vld [vmem:[#allocation7 + $0x48] sm:$0xff]
    %v77 = vld [vmem:[#allocation7 + $0x50] sm:$0xff]
    %v78 = vld [vmem:[#allocation7 + $0x58] sm:$0xff]
    %v79 = vld [vmem:[#allocation7 + $0x60] sm:$0xff]
    %v80 = vld [vmem:[#allocation7 + $0x68] sm:$0xff]
    %v81 = vld [vmem:[#allocation7 + $0x70] sm:$0xff]
    %v82 = vld [vmem:[#allocation7 + $0x78] sm:$0xff]
    %v83 = vld [vmem:[%s3] sm:$0x1]
    %v85 = vlaneseq
    %v86 = vshrl.u32 %v85, 7
    %v87 = vsub.s32 0, %v86
    %v88 = vrot.slane %v83, %v87
    %90 = vmatprep.subr.mxu0 0.0
    %91 = vmatpush1.msra.mxu0 %v67
    %92 = vmatprep.subr.mxu0 0.0
    %93 = vmatpush1.msra.mxu0 %v68
    %94 = vmatprep.subr.mxu0 0.0
    %95 = vmatpush1.msra.mxu0 %v69
    %96 = vmatprep.subr.mxu0 0.0
    %97 = vmatpush1.msra.mxu0 %v70
    %98 = vmatprep.subr.mxu0 0.0
    %99 = vmatpush1.msra.mxu0 %v71
    %100 = vmatprep.subr.mxu0 0.0
    %101 = vmatpush1.msra.mxu0 %v72
    %102 = vmatprep.subr.mxu0 0.0
    %103 = vmatpush1.msra.mxu0 %v73
    %104 = vmatprep.subr.mxu0 0.0
    %105 = vmatpush1.msra.mxu0 %v74
    %106 = vmatprep.subr.mxu0 0.0
    %107 = vmatpush1.msra.mxu0 %v75
    %108 = vmatprep.subr.mxu0 0.0
    %109 = vmatpush1.msra.mxu0 %v76
    %110 = vmatprep.subr.mxu0 0.0
    %111 = vmatpush1.msra.mxu0 %v77
    %112 = vmatprep.subr.mxu0 0.0
    %113 = vmatpush1.msra.mxu0 %v78
    %114 = vmatprep.subr.mxu0 0.0
    %115 = vmatpush1.msra.mxu0 %v79
    %116 = vmatprep.subr.mxu0 0.0
    %117 = vmatpush1.msra.mxu0 %v80
    %118 = vmatprep.subr.mxu0 0.0
    %119 = vmatpush1.msra.mxu0 %v81
    %120 = vmatprep.subr.mxu0 0.0
    %121 = vmatpush1.msra.mxu0 %v82
    %122 = vmatprep.subr.mxu0 0.0
    %123 = vmatpush1.msra.mxu0 0.0
    %124 = vmatprep.subr.mxu0 0.0
    %125 = vmatpush1.msra.mxu0 0.0
    %126 = vmatprep.subr.mxu0 0.0
    %127 = vmatpush1.msra.mxu0 0.0
    %128 = vmatprep.subr.mxu0 0.0
    %129 = vmatpush1.msra.mxu0 0.0
    %130 = vmatprep.subr.mxu0 0.0
    %131 = vmatpush1.msra.mxu0 0.0
    %132 = vmatprep.subr.mxu0 0.0
    %133 = vmatpush1.msra.mxu0 0.0
    %134 = vmatprep.subr.mxu0 0.0
    %135 = vmatpush1.msra.mxu0 0.0
    %136 = vmatprep.subr.mxu0 0.0
    %137 = vmatpush1.msra.mxu0 0.0
    %138 = vmatprep.subr.mxu0 0.0
    %139 = vmatpush1.msra.mxu0 0.0
    %140 = vmatprep.subr.mxu0 0.0
    %141 = vmatpush1.msra.mxu0 0.0
    %142 = vmatprep.subr.mxu0 0.0
    %143 = vmatpush1.msra.mxu0 0.0
    %144 = vmatprep.subr.mxu0 0.0
    %145 = vmatpush1.msra.mxu0 0.0
    %146 = vmatprep.subr.mxu0 0.0
    %147 = vmatpush1.msra.mxu0 0.0
    %148 = vmatprep.subr.mxu0 0.0
    %149 = vmatpush1.msra.mxu0 0.0
    %150 = vmatprep.subr.mxu0 0.0
    %151 = vmatpush1.msra.mxu0 0.0
    %152 = vmatprep.subr.mxu0 0.0
    %153 = vmatpush1.msra.mxu0 0.0
    %154 = vmatprep.mubr.f32.mxu0 0.0
    %155 = vmatmul.mubr.f32.gmra.mrb[0].mxu0 %v65
    %v156 = vpop.f32.mrb[0].mxu0
    %v157 = vadd.f32 %v88, %v156
    %v158 = vpop.f32.mrb[0].mxu0
    %159 = vmatprep.mubr.f32.mxu0 0.0
    %160 = vmatmul.mubr.f32.gmra.mrb[0].mxu0 %v66
    %v161 = vpop.f32.mrb[0].mxu0
    %v162 = vadd.f32 %v88, %v161
    %v163 = vpop.f32.mrb[0].mxu0
    %164 = vdwg.mxu0
    %v165 = vld [vmem:[#allocation5] sm:$0xff]
    %v166 = vld [vmem:[#allocation5 + $0x8] sm:$0xff]
    %v167 = vadd.f32 %v157, %v165
    %v168 = vadd.f32 %v162, %v166
    %169 = vadd.xlane.f32.xlu0 %v167
    %v170 = vpop.xlane.xlu0 %169
    %171 = vadd.xlane.f32.xlu0 %v168
    %v172 = vpop.xlane.xlu0 %171
    %v173 = vmul.f32 %v167, %v167
    %v174 = vmul.f32 %v168, %v168
    %175 = vadd.xlane.f32.xlu0 %v173
    %v176 = vpop.xlane.xlu0 %175
    %177 = vadd.xlane.f32.xlu0 %v174
    %v178 = vpop.xlane.xlu0 %177
    %v179 = vmul.f32 %v170, 0.03125
    %v180 = vmul.f32 %v172, 0.03125
    %v181 = vmul.f32 %v176, 0.03125
    %v182 = vmul.f32 %v178, 0.03125
    %v183 = vmul.f32 %v179, %v179
    %v184 = vmul.f32 %v180, %v180
    %v185 = vsub.f32 %v181, %v183
    %v186 = vsub.f32 %v182, %v184
    %v187 = vadd.f32 %v185, 1e-12
    %v188 = vadd.f32 %v186, 1e-12
    %v189 = vrsqrt.pop %v187
    %v190 = vrsqrt.pop %v188
    %v191 = vsub.f32 %v167, %v179
    %v192 = vsub.f32 %v168, %v180
    %v193 = vld [vmem:[%s4] sm:$0x1]
    %v195 = vlaneseq
    %v196 = vshrl.u32 %v195, 7
    %v197 = vsub.s32 0, %v196
    %v198 = vrot.slane %v193, %v197
    %v200 = vmul.f32 %v189, %v198
    %v201 = vmul.f32 %v190, %v198
    %v202 = vmul.f32 %v191, %v200
    %v203 = vmul.f32 %v192, %v201
    %v204 = vld [vmem:[%s5] sm:$0x1]
    %v206 = vlaneseq
    %v207 = vshrl.u32 %v206, 7
    %v208 = vsub.s32 0, %v207
    %v209 = vrot.slane %v204, %v208
    %v211 = vadd.f32 %v202, %v209
    %v212 = vadd.f32 %v203, %v209
    %213 = vst [vmem:[#allocation8] sm:$0xff] %v211
    %214 = vst [vmem:[#allocation8 + $0x8] sm:$0xff] %v212
    // Predicated region
    $region38: #{tpu_custom_call.1} parent=1 // pred_check
      _
    $region39: #{tpu_custom_call.1} parent=1 // pred_check_branch
      %216 = sbr.rel (0) target = $region41
    $region40: #{tpu_custom_call.1} parent=1 // pred_region
      %s218 = ssub.s32 256, 256
      %219 = vsyncadd [#allocation4], %s218
      %s220 = sshll.u32 [#allocation8], 4
      %s221 = int_to_ptr.vmem [resolvable:$true] %s220
      %226 = dma.vmem_to_hbm [thread:$0]  %s221, 256, %s6, [#allocation4], 128, 128, 8
    $region41: #{tpu_custom_call.1} parent=1 // pred_fallthru
      _
    // Predicated region
    $region42: #{tpu_custom_call.1} parent=1 // pred_check
      _
    $region43: #{tpu_custom_call.1} parent=1 // pred_check_branch
      %228 = sbr.rel (0) target = $region45
    $region44: #{tpu_custom_call.1} parent=1 // pred_region
      %229 = dma.done [#allocation4], 256
    $region45: #{tpu_custom_call.1} parent=1 // pred_fallthru
      _
    %230 = vsyncpa [#allocation3], 1
    %231 = vsyncpa [#allocation6], 1
    %232 = vsyncpa [#allocation4], 1

</llo_original>
